<compile_context>
chip_gen: v7x
topology: tpu7x:2x2x1
jax: 0.10.0
libtpu: 0.0.40
codegen_flags: <defaults>
</compile_context>

<pallas_src>
import functools

import jax
import jax.numpy as jnp
from jax.experimental import pallas as pl
from jax.experimental.pallas import tpu as pltpu


def _sublane_multiple(dtype):
    # 8 for 4-byte dtypes, 16 for bf16/f16, 32 for int8/fp8.
    return max(8, 32 // jnp.dtype(dtype).itemsize)


def _lane_pad(n):
    return max(128, ((n + 127) // 128) * 128)


def _accumulate_rows(out_ref, x, rows):
    """Sum the leading `rows` rows of x ([rows, L]) into out_ref ([8, L]).

    Full 8-row slabs are added as whole vregs (pure VPU work, no cross-sublane
    reduce in the hot loop); a partial tail slab (only possible on a
    single-step grid) uses a masked partial-row read-modify-write.
    """
    n_full = (rows // 8) * 8
    if n_full:
        part = x[0:8]
        for r0 in range(8, n_full, 8):
            part = part + x[r0:r0 + 8]
        out_ref[...] += part
    rem = rows - n_full
    if rem:
        out_ref[0:rem, :] += x[n_full:rows, :]


def _ordered_pts_l1_kernel(*refs, S, tS, O, PC, ns_per_core, has_weight):
    """Streaming per-order L1 partial-sum kernel.

    refs (has_weight=True):  pred[tS,PC], tgt[tS,OPC], w[tS,OPC], out[8,OPC]
    refs (has_weight=False): pred[tS,PC], tgt[tS,OPC],            out[8,OPC]
    """
    if has_weight:
        pred_ref, tgt_ref, w_ref, out_ref = refs
    else:
        pred_ref, tgt_ref, out_ref = refs
        w_ref = None

    c = pl.program_id(0)          # parallel (megacore) axis
    s = pl.program_id(1)          # streaming S axis (arbitrary / accumulating)
    OPC = O * PC

    @pl.when(s == 0)
    def _init():
        out_ref[...] = jnp.zeros_like(out_ref)

    pred = pred_ref[...].astype(jnp.float32)              # [tS, PC]
    if O > 1:
        # Replicate pred across the order groups along the lane axis so the
        # whole loss stays lane-dense [tS, O*PC].
        pred = jnp.concatenate([pred] * O, axis=-1)        # [tS, OPC]
    tgt = tgt_ref[...].astype(jnp.float32)                 # [tS, OPC]
    loss = jnp.abs(pred - tgt)
    if has_weight:
        loss = loss * w_ref[...].astype(jnp.float32)

    if S % tS != 0:
        # Only the very last block (last core, last step) has a ragged tail;
        # gate the iota/compare/select there instead of paying it every step.
        is_tail = jnp.logical_and(c == pl.num_programs(0) - 1,
                                  s == ns_per_core - 1)

        @pl.when(is_tail)
        def _tail():
            row_start = (c * ns_per_core + s) * tS
            rows = jax.lax.broadcasted_iota(jnp.int32, (tS, OPC), 0) + row_start
            # Mask AFTER the weight multiply so garbage*0 -> NaN is replaced.
            _accumulate_rows(out_ref, jnp.where(rows < S, loss, 0.0), tS)

        @pl.when(jnp.logical_not(is_tail))
        def _body():
            _accumulate_rows(out_ref, loss, tS)
    else:
        _accumulate_rows(out_ref, loss, tS)


def ordered_pts_l1_loss(pred, target, weight=None, avg_factor=None,
                        loss_weight=1.0, reduction="mean", tile_s=None):
    """JAX/Pallas equivalent of OrderedPtsL1Loss.forward (reduction='mean').

    pred:   [S, P, C]
    target: [S, O, P, C]
    weight: [S, O, P, C] or None
    returns: [O] float32
    """
    # TODO(synk): reduction_override 'none'/'sum' paths of the PyTorch module
    # are not implemented (module default 'mean' only).
    assert reduction == "mean", "only the default 'mean' reduction is implemented"
    if avg_factor is None:
        raise ValueError("avg_factor should not be none for OrderedPtsL1Loss")

    S, P, C = pred.shape
    S2, O, P2, C2 = target.shape
    assert (S2, P2, C2) == (S, P, C)
    PC = P * C
    OPC = O * PC
    has_weight = weight is not None

    if S == 0 or OPC == 0:
        # PyTorch early-exit (target.numel() == 0): zero loss.
        return jnp.zeros((O,), jnp.float32)

    # Free, contiguous reshapes only (no transpose, no wrapper-side upcast).
    pred2 = pred.reshape(S, PC)
    tgt2 = target.reshape(S, OPC)                 # lane-dense big stream
    operands = [pred2, tgt2]
    if has_weight:
        assert weight.shape == target.shape
        operands.append(weight.reshape(S, OPC))

    # --- tile selection with PADDED (vreg-tiled) VMEM accounting -------------
    p_item = jnp.dtype(pred.dtype).itemsize
    t_item = jnp.dtype(target.dtype).itemsize
    w_item = jnp.dtype(weight.dtype).itemsize if has_weight else 0
    opc_pad, pc_pad = _lane_pad(OPC), _lane_pad(PC)
    # Padded VMEM bytes brought in per S-row by all streams.
    row_bytes = opc_pad * t_item + opc_pad * w_item + pc_pad * p_item

    sub = max(_sublane_multiple(pred.dtype), _sublane_multiple(target.dtype),
              _sublane_multiple(weight.dtype) if has_weight else 8)

    # ~16 MiB total for the double-buffered streaming tiles (~4-8 MiB per
    # stream tile): big enough to amortize the ~0.35us/step overhead even at
    # v7x's 3.2 TB/s, small enough for every scoped-VMEM budget (16 MiB v5e,
    # 32 MiB v6e/v7x) once the explicit limit below is applied.
    stream_budget = 16 * 1024 * 1024
    ts_cap = stream_budget // (2 * row_bytes)
    ts_cap = max(sub, min(1024, (ts_cap // sub) * sub))
    if tile_s is not None:
        ts_cap = max(sub, (int(tile_s) // sub) * sub)
    tS = S if S <= ts_cap else ts_cap
    nS = pl.cdiv(S, tS)

    # Megacore: shard the S blocks over a leading "parallel" axis (2 TCs on
    # v7x; a harmless sequential split on v5e/v6e).
    NC = 2 if (nS >= 2 and nS % 2 == 0) else 1
    ns_per_core = nS // NC

    # Explicit VMEM limit sized to the padded double-buffered working set.
    acc_bytes = 8 * opc_pad * 4
    needed = 2 * tS * row_bytes + 2 * acc_bytes
    vmem_limit = int(min(max(needed + (8 << 20), 32 << 20), 128 << 20))

    def s_idx(c, s):
        return c * ns_per_core + s

    in_specs = [pl.BlockSpec((tS, PC), lambda c, s: (s_idx(c, s), 0)),
                pl.BlockSpec((tS, OPC), lambda c, s: (s_idx(c, s), 0))]
    if has_weight:
        in_specs.append(pl.BlockSpec((tS, OPC), lambda c, s: (s_idx(c, s), 0)))

    bytes_accessed = int(S * PC * p_item + S * OPC * (t_item + w_item)
                         + NC * 8 * OPC * 4)
    flops = int((3 if has_weight else 2) * S * OPC)

    kernel = functools.partial(_ordered_pts_l1_kernel, S=S, tS=tS, O=O, PC=PC,
                               ns_per_core=ns_per_core, has_weight=has_weight)

    out = pl.pallas_call(
        kernel,
        out_shape=jax.ShapeDtypeStruct((NC * 8, OPC), jnp.float32),
        grid_spec=pltpu.PrefetchScalarGridSpec(
            num_scalar_prefetch=0,
            grid=(NC, ns_per_core),
            in_specs=in_specs,
            # Per-core lane-dense partial-sum block, resident across the S axis.
            out_specs=pl.BlockSpec((8, OPC), lambda c, s: (c, 0)),
        ),
        compiler_params=pltpu.CompilerParams(
            dimension_semantics=("parallel", "arbitrary"),
            vmem_limit_bytes=vmem_limit),
        cost_estimate=pl.CostEstimate(flops=flops, transcendentals=0,
                                      bytes_accessed=bytes_accessed),
    )(*operands)

    # Tiny epilogue in plain XLA: per-core / per-sublane partial sums -> [O].
    per_order = out.reshape(NC * 8, O, PC).sum(axis=(0, 2))
    return loss_weight * per_order / jnp.asarray(avg_factor, jnp.float32)


if __name__ == "__main__":
    key = jax.random.PRNGKey(0)
    ks = jax.random.split(key, 12)
    avg_factor = 7.0
    loss_weight = 1.5

    def ref_loss(pred, target, weight):
        l = jnp.abs(pred[:, None] - target)
        if weight is not None:
            l = l * weight
        return loss_weight * l.sum(axis=(0, 2, 3)) / avg_factor

    def check(pred, target, weight, **kw):
        out = ordered_pts_l1_loss(pred, target, weight, avg_factor=avg_factor,
                                  loss_weight=loss_weight, **kw)
        out = jax.block_until_ready(out)
        ref = ref_loss(pred, target, weight)
        assert out.shape == ref.shape, (out.shape, ref.shape)
        assert jnp.allclose(out, ref, rtol=1e-5, atol=1e-5), (out, ref)

    # Case 1: single grid step; weighted and weight-less paths.
    S, O, P, C = 8, 4, 8, 2
    pred = jax.random.normal(ks[0], (S, P, C), dtype=jnp.float32)
    target = jax.random.normal(ks[1], (S, O, P, C), dtype=jnp.float32)
    weight = (jax.random.uniform(ks[2], (S, O, P, C)) > 0.3).astype(jnp.float32)
    check(pred, target, weight)
    check(pred, target, None)

    # Case 2: multi-step grid with a ragged S tail (gated tail masking).
    S, O, P, C = 20, 4, 8, 2
    pred = jax.random.normal(ks[3], (S, P, C), dtype=jnp.float32)
    target = jax.random.normal(ks[4], (S, O, P, C), dtype=jnp.float32)
    weight = (jax.random.uniform(ks[5], (S, O, P, C)) > 0.3).astype(jnp.float32)
    check(pred, target, weight, tile_s=8)

    # Case 3: even number of S blocks -> 2-way "parallel" (megacore) grid axis.
    S, O, P, C = 32, 5, 8, 2
    pred = jax.random.normal(ks[6], (S, P, C), dtype=jnp.float32)
    target = jax.random.normal(ks[7], (S, O, P, C), dtype=jnp.float32)
    weight = (jax.random.uniform(ks[8], (S, O, P, C)) > 0.3).astype(jnp.float32)
    check(pred, target, weight, tile_s=8)

    # Case 4: single step with S not a multiple of 8 (partial-slab accumulate).
    S, O, P, C = 20, 4, 8, 2
    pred = jax.random.normal(ks[9], (S, P, C), dtype=jnp.float32)
    target = jax.random.normal(ks[10], (S, O, P, C), dtype=jnp.float32)
    check(pred, target, None)

    print("KERNEL_OK")
</pallas_src>

<mosaic_0001>
module attributes {stable_mosaic.version = 11 : i64} {
  func.func @_ordered_pts_l1_kernel(%arg0: i32, %arg1: i32, %arg2: memref<8x16xf32, #tpu.memory_space<vmem>>, %arg3: memref<8x64xf32, #tpu.memory_space<vmem>>, %arg4: memref<8x64xf32, #tpu.memory_space<vmem>>, %arg5: memref<8x64xf32, #tpu.memory_space<vmem>>) attributes {dimension_semantics = [#tpu.dimension_semantics<parallel>, #tpu.dimension_semantics<arbitrary>], iteration_bounds = array<i64: 1, 1>, scalar_prefetch = 0 : i64, scratch_operands = 0 : i64, tpu.core_type = #tpu.core_type<tc>, window_params = [{transform_indices = @transform_0, window_bounds = array<i64: 8, 16>}, {transform_indices = @transform_1, window_bounds = array<i64: 8, 64>}, {transform_indices = @transform_2, window_bounds = array<i64: 8, 64>}, {transform_indices = @transform_3, window_bounds = array<i64: 8, 64>}]} {
    %c0_i32 = arith.constant 0 : i32
    %0 = arith.cmpi eq, %arg1, %c0_i32 : i32
    %1 = arith.extui %0 : i1 to i32
    %c0_i32_0 = arith.constant 0 : i32
    %2 = arith.cmpi ne, %1, %c0_i32_0 : i32
    scf.if %2 {
      %cst = arith.constant 0.000000e+00 : f32
      %13 = vector.broadcast %cst : f32 to vector<8x64xf32>
      %c0_10 = arith.constant 0 : index
      %c0_11 = arith.constant 0 : index
      %14 = vector.load %arg5[%c0_10, %c0_11] : memref<8x64xf32, #tpu.memory_space<vmem>>, vector<8x64xf32>
      tpu.vector_store %arg5[%c0_10, %c0_11], %13 {strides = array<i32>} : memref<8x64xf32, #tpu.memory_space<vmem>>, vector<8x64xf32>,
    } else {
    }
    %c0 = arith.constant 0 : index
    %c0_1 = arith.constant 0 : index
    %3 = vector.load %arg2[%c0, %c0_1] : memref<8x16xf32, #tpu.memory_space<vmem>>, vector<8x16xf32>
    %4 = tpu.concatenate %3, %3, %3, %3 in 1 : vector<8x16xf32>, vector<8x16xf32>, vector<8x16xf32>, vector<8x16xf32> -> vector<8x64xf32>
    %c0_2 = arith.constant 0 : index
    %c0_3 = arith.constant 0 : index
    %5 = vector.load %arg3[%c0_2, %c0_3] : memref<8x64xf32, #tpu.memory_space<vmem>>, vector<8x64xf32>
    %6 = arith.subf %4, %5 : vector<8x64xf32>
    %7 = math.absf %6 : vector<8x64xf32>
    %c0_4 = arith.constant 0 : index
    %c0_5 = arith.constant 0 : index
    %8 = vector.load %arg4[%c0_4, %c0_5] : memref<8x64xf32, #tpu.memory_space<vmem>>, vector<8x64xf32>
    %9 = arith.mulf %7, %8 : vector<8x64xf32>
    %c0_6 = arith.constant 0 : index
    %c0_7 = arith.constant 0 : index
    %10 = vector.load %arg5[%c0_6, %c0_7] : memref<8x64xf32, #tpu.memory_space<vmem>>, vector<8x64xf32>
    %11 = arith.addf %10, %9 : vector<8x64xf32>
    %c0_8 = arith.constant 0 : index
    %c0_9 = arith.constant 0 : index
    %12 = vector.load %arg5[%c0_8, %c0_9] : memref<8x64xf32, #tpu.memory_space<vmem>>, vector<8x64xf32>
    tpu.vector_store %arg5[%c0_8, %c0_9], %11 {strides = array<i32>} : memref<8x64xf32, #tpu.memory_space<vmem>>, vector<8x64xf32>,
    return
  }
  func.func @transform_0(%arg0: i32, %arg1: i32) -> (i32, i32) {
    %c1_i32 = arith.constant 1 : i32
    %0 = arith.muli %arg0, %c1_i32 : i32
    %1 = arith.addi %0, %arg1 : i32
    %c0_i32 = arith.constant 0 : i32
    %c0_i32_0 = arith.constant 0 : i32
    return %1, %c0_i32 : i32, i32
  }
  func.func @transform_1(%arg0: i32, %arg1: i32) -> (i32, i32) {
    %c1_i32 = arith.constant 1 : i32
    %0 = arith.muli %arg0, %c1_i32 : i32
    %1 = arith.addi %0, %arg1 : i32
    %c0_i32 = arith.constant 0 : i32
    %c0_i32_0 = arith.constant 0 : i32
    return %1, %c0_i32 : i32, i32
  }
  func.func @transform_2(%arg0: i32, %arg1: i32) -> (i32, i32) {
    %c1_i32 = arith.constant 1 : i32
    %0 = arith.muli %arg0, %c1_i32 : i32
    %1 = arith.addi %0, %arg1 : i32
    %c0_i32 = arith.constant 0 : i32
    %c0_i32_0 = arith.constant 0 : i32
    return %1, %c0_i32 : i32, i32
  }
  func.func @transform_3(%arg0: i32, %arg1: i32) -> (i32, i32) {
    %c0_i32 = arith.constant 0 : i32
    %c0_i32_0 = arith.constant 0 : i32
    return %arg0, %c0_i32 : i32, i32
  }
}

</mosaic_0001>

<llo_original>
// kernel: tpu_custom_call.1
$region0: #{tpu_custom_call.1}
  #allocation0 [shape = 'u32[]', space=smem, size = 0x4, offset = 0x4, fixed_abs, tag = 'smem constant byte address 0x4 - core index']
  #allocation1 [shape = 'u32[144,128]{1,0:T(1,128)}', space=vmem, size = 0x12000, scoped, tag = 'internal scratch']
  %s0 = inlined_call_operand.hbm [shape: f32[8,16], index: 0, kind: input, shape index: {}]
  %s1 = inlined_call_operand.hbm [shape: f32[8,64], index: 1, kind: input, shape index: {}]
  %s2 = inlined_call_operand.hbm [shape: f32[8,64], index: 2, kind: input, shape index: {}]
  %s3 = inlined_call_operand.hbm [shape: f32[8,64], index: 3, kind: output, shape index: {}]
  %s4 = sld [smem:[#allocation0]]
  $region38: #{tpu_custom_call.1} parent=0
    _
  %s6 = ssub.s32 1, %s4
  %s7 = scalar_select 0, %s6, %s4
  $region1: #{tpu_custom_call.1} parent=0
    #allocation2 [shape = 'u8[4096]{0}', space=vmem, size = 0x1000, scoped, tag = 'input window, operand 0, single buffered']
    #allocation3 [shape = 's32[1]{0}', space=sflag, size = 0x4, scoped, tag = 'scoped memory for tpu_custom_call.1']
    #allocation4 [shape = 's32[1]{0}', space=sflag, size = 0x4, scoped, tag = 'scoped memory for tpu_custom_call.1']
    #allocation5 [shape = 'u8[4096]{0}', space=vmem, size = 0x1000, scoped, tag = 'input window, operand 1, single buffered']
    #allocation6 [shape = 's32[1]{0}', space=sflag, size = 0x4, scoped, tag = 'scoped memory for tpu_custom_call.1']
    #allocation7 [shape = 'u8[4096]{0}', space=vmem, size = 0x1000, scoped, tag = 'input window, operand 2, single buffered']
    #allocation8 [shape = 'u8[4096]{0}', space=vmem, size = 0x1000, scoped, tag = 'output window, operand 0, single buffered']
    %8 = vsyncpa [#allocation3], 0
    %9 = vsyncpa [#allocation6], 0
    %10 = vsyncpa [#allocation4], 0
    // Predicated region
    $region2: #{tpu_custom_call.1} parent=1 // pred_check
      _
    $region3: #{tpu_custom_call.1} parent=1 // pred_check_branch
      %12 = sbr.rel (0) target = $region5
    $region4: #{tpu_custom_call.1} parent=1 // pred_region
      %s13 = sadd.s32 0, 0
      %s15 = ssub.s32 128, 128
      %16 = vsyncadd [#allocation3], %s15
      %s17 = smul.addr %s13, 128
      %s18 = scalar_lea.hbm %s0, %s17
      %s20 = sshll.u32 [#allocation2], 4
      %s21 = int_to_ptr.vmem [resolvable:$true] %s20
      %23 = dma.hbm_to_vmem [thread:$0]  %s18, 128, %s21, [#allocation3]
    $region5: #{tpu_custom_call.1} parent=1 // pred_fallthru
      _
    // Predicated region
    $region6: #{tpu_custom_call.1} parent=1 // pred_check
      _
    $region7: #{tpu_custom_call.1} parent=1 // pred_check_branch
      %25 = sbr.rel (0) target = $region9
    $region8: #{tpu_custom_call.1} parent=1 // pred_region
      %s26 = sadd.s32 0, 0
      %s28 = ssub.s32 128, 128
      %29 = vsyncadd [#allocation6], %s28
      %s30 = smul.addr %s26, 128
      %s31 = scalar_lea.hbm %s1, %s30
      %s33 = sshll.u32 [#allocation5], 4
      %s34 = int_to_ptr.vmem [resolvable:$true] %s33
      %36 = dma.hbm_to_vmem [thread:$0]  %s31, 128, %s34, [#allocation6]
    $region9: #{tpu_custom_call.1} parent=1 // pred_fallthru
      _
    // Predicated region
    $region10: #{tpu_custom_call.1} parent=1 // pred_check
      _
    $region11: #{tpu_custom_call.1} parent=1 // pred_check_branch
      %38 = sbr.rel (0) target = $region13
    $region12: #{tpu_custom_call.1} parent=1 // pred_region
      %s39 = sadd.s32 0, 0
      %s41 = ssub.s32 128, 128
      %42 = vsyncadd [#allocation6], %s41
      %s43 = smul.addr %s39, 128
      %s44 = scalar_lea.hbm %s2, %s43
      %s46 = sshll.u32 [#allocation7], 4
      %s47 = int_to_ptr.vmem [resolvable:$true] %s46
      %49 = dma.hbm_to_vmem [thread:$0]  %s44, 128, %s47, [#allocation6]
    $region13: #{tpu_custom_call.1} parent=1 // pred_fallthru
      _
    // Predicated region
    $region14: #{tpu_custom_call.1} parent=1 // pred_check
      _
    $region15: #{tpu_custom_call.1} parent=1 // pred_check_branch
      %51 = sbr.rel (0) target = $region17
    $region16: #{tpu_custom_call.1} parent=1 // pred_region
      %52 = dma.done [#allocation3], 128
    $region17: #{tpu_custom_call.1} parent=1 // pred_fallthru
      _
    // Predicated region
    $region18: #{tpu_custom_call.1} parent=1 // pred_check
      _
    $region19: #{tpu_custom_call.1} parent=1 // pred_check_branch
      %54 = sbr.rel (0) target = $region21
    $region20: #{tpu_custom_call.1} parent=1 // pred_region
      %55 = dma.done [#allocation6], 128
    $region21: #{tpu_custom_call.1} parent=1 // pred_fallthru
      _
    // Predicated region
    $region22: #{tpu_custom_call.1} parent=1 // pred_check
      _
    $region23: #{tpu_custom_call.1} parent=1 // pred_check_branch
      %57 = sbr.rel (0) target = $region25
    $region24: #{tpu_custom_call.1} parent=1 // pred_region
      %58 = dma.done [#allocation6], 128
    $region25: #{tpu_custom_call.1} parent=1 // pred_fallthru
      _
    %s59 = sadd.s32 0, 0
    %s60 = sadd.s32 0, 0
    %s61 = sadd.s32 0, 0
    %p62 = scmp.eq.s32.totalorder 0, 0
    // Predicated region
    $region26: #{tpu_custom_call.1} parent=1 // pred_check
      %p63 = pneg %p62
    $region27: #{tpu_custom_call.1} parent=1 // pred_check_branch
      %65 = sbr.rel (%p63) target = $region29
    $region28: #{tpu_custom_call.1} parent=1 // pred_region
      %vm66 = vcmask 523264
      %67 = vst.msk [vmem:[#allocation8] sm:$0xff] %vm66, 0.0
    $region29: #{tpu_custom_call.1} parent=1 // pred_fallthru
      _
    %v68 = vld [vmem:[#allocation2] sm:$0xff]
    %70 = vrot.lane.b32.xlu0 %v68, 16
    %v71 = vpop.permute.xlu0 %70
    %73 = vrot.lane.b32.xlu0 %v68, 32
    %v74 = vpop.permute.xlu0 %73
    %76 = vrot.lane.b32.xlu0 %v68, 48
    %v77 = vpop.permute.xlu0 %76
    %vm79 = vcmask 130048
    %v80 = vsel %vm79, %v68, %v71
    %vm81 = vcmask 261120
    %v82 = vsel %vm81, %v80, %v74
    %vm83 = vcmask 392192
    %v84 = vsel %vm83, %v82, %v77
    %v85 = vld [vmem:[#allocation5] sm:$0xff]
    %v86 = vsub.f32 %v84, %v85
    %v87 = vand.u32 2147483647, %v86
    %v88 = vld [vmem:[#allocation7] sm:$0xff]
    %v89 = vmul.f32 %v87, %v88
    %v90 = vld [vmem:[#allocation8] sm:$0xff]
    %v91 = vadd.f32 %v90, %v89
    %vm92 = vcmask 523264
    %93 = vst.msk [vmem:[#allocation8] sm:$0xff] %vm92, %v91
    // Predicated region
    $region30: #{tpu_custom_call.1} parent=1 // pred_check
      _
    $region31: #{tpu_custom_call.1} parent=1 // pred_check_branch
      %95 = sbr.rel (0) target = $region33
    $region32: #{tpu_custom_call.1} parent=1 // pred_region
      %s97 = ssub.s32 128, 128
      %98 = vsyncadd [#allocation4], %s97
      %s100 = sshll.u32 [#allocation8], 4
      %s101 = int_to_ptr.vmem [resolvable:$true] %s100
      %103 = dma.vmem_to_hbm [thread:$0]  %s101, 128, %s3, [#allocation4]
    $region33: #{tpu_custom_call.1} parent=1 // pred_fallthru
      _
    // Predicated region
    $region34: #{tpu_custom_call.1} parent=1 // pred_check
      _
    $region35: #{tpu_custom_call.1} parent=1 // pred_check_branch
      %105 = sbr.rel (0) target = $region37
    $region36: #{tpu_custom_call.1} parent=1 // pred_region
      %106 = dma.done [#allocation4], 128
    $region37: #{tpu_custom_call.1} parent=1 // pred_fallthru
      _
    %107 = vsyncpa [#allocation3], 1
    %108 = vsyncpa [#allocation6], 1
    %109 = vsyncpa [#allocation4], 1

</llo_original>
